<compile_context>
chip_gen: v5e
topology: v5e:2x2
jax: 0.10.0
libtpu: 0.0.40
codegen_flags: <defaults>
</compile_context>

<pallas_src>
import jax
import jax.numpy as jnp
from jax.experimental import pallas as pl
from jax.experimental.pallas import tpu as pltpu

HIDDEN = 128            # fixed by nn.Linear(num_targets, 128)
INTERLEAVE = 128        # batch elements packed per kernel row (lane-dense output)
X_TILE_BYTES = 4 << 20  # target activation bytes per grid step (double-buffered)
W_MAT_BYTES = 4 << 20   # cap on the resident block-diagonal weight


def _round_up(n, m):
    return ((n + m - 1) // m) * m


def _choose_interleave(nt):
    """Largest power-of-two interleave (<=128) whose block-diagonal weight
    stays under W_MAT_BYTES.  For typical num_targets this is 128."""
    f = INTERLEAVE
    while f > 8 and f * f * nt * 4 > W_MAT_BYTES:
        f //= 2
    return f


def policy_kernel(x_ref, w_ref, b_ref, o_ref):
    # x_ref: [rpt, F*nt]      -- F batch elements packed per row (lane-dense)
    # w_ref: [F*nt, F]        -- block-diagonal copies of the fused weight (resident)
    # b_ref: [1, 1] in SMEM   -- fused bias scalar
    # o_ref: [rpt, F]         -- o[r, c] is the output of batch element F*r + c
    acc = jnp.dot(x_ref[...], w_ref[...], preferred_element_type=jnp.float32)
    o_ref[...] = (acc + b_ref[0, 0]).astype(o_ref.dtype)


def fuse_policy_params(w1, b1, w2, b2, interleave):
    """Fuse fc2(fc1(x)) into one affine map (valid: no nonlinearity between
    layers) and expand the fused weight vector into the block-diagonal matrix
    consumed by the interleaved kernel.  Hoist per parameter update."""
    nt = w1.shape[1]
    w_fused = (w2 @ w1).reshape(nt)             # [nt]   == W2 @ W1
    b_fused = (w2 @ b1 + b2).reshape(1, 1)      # scalar == W2 @ b1 + b2
    # w_mat[i*nt + j, c] = w_fused[j] if i == c else 0
    w_mat = jnp.kron(jnp.eye(interleave, dtype=w_fused.dtype),
                     w_fused.reshape(nt, 1))    # [interleave*nt, interleave]
    return w_mat, b_fused


def policy_forward(x, w1, b1, w2, b2):
    """x: [B, num_targets]; w1: [128, num_targets]; b1: [128];
    w2: [1, 128]; b2: [1].  Returns [B, 1] (same math as fc2(fc1(x)))."""
    B, nt = x.shape
    F = _choose_interleave(nt)

    w_mat, b_fused = fuse_policy_params(w1, b1, w2, b2, F)

    # Pad only to a multiple of 8*F so the packed-row count is a multiple of
    # the 8-sublane tile; do NOT pad to a tile multiple (wasted DMA).
    Bp = _round_up(B, 8 * F)
    xp = x if Bp == B else jnp.pad(x, ((0, Bp - B), (0, 0)))
    rows = Bp // F
    x_r = xp.reshape(rows, F * nt)   # free row-major reshape -> lane-dense rows

    # Rows per grid step: ~X_TILE_BYTES of activations (HBM-bound), but split
    # into >= 2 tiles when possible so megacore (v7x) can shard the grid.
    row_bytes = F * nt * 4
    rpt = max(8, (X_TILE_BYTES // row_bytes) // 8 * 8)
    rpt = min(rpt, max(8, _round_up(pl.cdiv(rows, 2), 8)))
    grid_steps = pl.cdiv(rows, rpt)   # last block may be ragged (masked by Pallas)

    out_r = pl.pallas_call(
        policy_kernel,
        out_shape=jax.ShapeDtypeStruct((rows, F), x.dtype),
        grid=(grid_steps,),
        in_specs=[
            # Packed activation tile (double-buffered by Pallas).
            pl.BlockSpec((rpt, F * nt), lambda i: (i, 0)),
            # Fused block-diagonal weight: same block every step -> resident.
            pl.BlockSpec((F * nt, F), lambda i: (0, 0)),
            # Fused bias scalar lives in SMEM.
            pl.BlockSpec(memory_space=pltpu.SMEM),
        ],
        out_specs=pl.BlockSpec((rpt, F), lambda i: (i, 0)),
        compiler_params=pltpu.CompilerParams(
            dimension_semantics=("parallel",),   # shard batch tiles across TCs (v7x)
        ),
        cost_estimate=pl.CostEstimate(
            flops=2 * rows * (F * nt) * F,       # MXU work incl. structural zeros
            transcendentals=0,
            bytes_accessed=4 * (rows * F * nt + rows * F + F * nt * F + 1),
        ),
    )(x_r, w_mat, b_fused)

    # Undo packing: out_r[r, c] is batch element F*r + c.
    return out_r.reshape(Bp, 1)[:B]


def init_params(key, num_targets):
    """Deterministic init mimicking PyTorch's default Linear init
    (uniform in +/- 1/sqrt(fan_in))."""
    k1, k2, k3, k4 = jax.random.split(key, 4)
    bound1 = 1.0 / jnp.sqrt(num_targets)
    bound2 = 1.0 / jnp.sqrt(HIDDEN)
    w1 = jax.random.uniform(k1, (HIDDEN, num_targets), jnp.float32, -bound1, bound1)
    b1 = jax.random.uniform(k2, (HIDDEN,), jnp.float32, -bound1, bound1)
    w2 = jax.random.uniform(k3, (1, HIDDEN), jnp.float32, -bound2, bound2)
    b2 = jax.random.uniform(k4, (1,), jnp.float32, -bound2, bound2)
    return w1, b1, w2, b2


if __name__ == "__main__":
    key = jax.random.PRNGKey(0)
    num_targets = 32
    batch = 8

    kx, kp = jax.random.split(key)
    x = jax.random.normal(kx, (batch, num_targets), jnp.float32)
    w1, b1, w2, b2 = init_params(kp, num_targets)

    forward = jax.jit(policy_forward)

    # Small-batch check (single tile, padded-batch path).
    out = jax.block_until_ready(forward(x, w1, b1, w2, b2))
    ref = (x @ w1.T + b1) @ w2.T + b2
    assert out.shape == (batch, 1), out.shape
    assert jnp.allclose(out, ref, atol=1e-4, rtol=1e-4), "mismatch vs reference"

    # Non-divisible batch: exercises the multi-tile grid + ragged last block.
    x2 = jax.random.normal(kx, (2500, num_targets), jnp.float32)
    out2 = jax.block_until_ready(forward(x2, w1, b1, w2, b2))
    ref2 = (x2 @ w1.T + b1) @ w2.T + b2
    assert out2.shape == (2500, 1), out2.shape
    assert jnp.allclose(out2, ref2, atol=1e-4, rtol=1e-4), "mismatch vs reference (tiled)"

    print("KERNEL_OK")
</pallas_src>

<mosaic_0001>
module attributes {stable_mosaic.version = 11 : i64} {
  func.func @policy_kernel(%arg0: i32, %arg1: memref<8x4096xf32, #tpu.memory_space<vmem>>, %arg2: memref<4096x128xf32, #tpu.memory_space<vmem>>, %arg3: memref<1x1xf32, #tpu.memory_space<smem>>, %arg4: memref<8x128xf32, #tpu.memory_space<vmem>>) attributes {dimension_semantics = [#tpu.dimension_semantics<parallel>], iteration_bounds = array<i64: 1>, scalar_prefetch = 0 : i64, scratch_operands = 0 : i64, tpu.core_type = #tpu.core_type<tc>, window_params = [{transform_indices = @transform_0, window_bounds = array<i64: 8, 4096>}, {pipeline_mode = #tpu.pipeline_mode<synchronous>, transform_indices = @transform_1, window_bounds = array<i64: 4096, 128>}, {transform_indices = @transform_2, window_bounds = array<i64: 1, 1>}, {transform_indices = @transform_3, window_bounds = array<i64: 8, 128>}]} {
    %c0 = arith.constant 0 : index
    %c0_0 = arith.constant 0 : index
    %0 = vector.load %arg1[%c0, %c0_0] : memref<8x4096xf32, #tpu.memory_space<vmem>>, vector<8x4096xf32>
    %c0_1 = arith.constant 0 : index
    %c0_2 = arith.constant 0 : index
    %1 = vector.load %arg2[%c0_1, %c0_2] : memref<4096x128xf32, #tpu.memory_space<vmem>>, vector<4096x128xf32>
    %cst = arith.constant dense<0.000000e+00> : vector<8x128xf32>
    %2 = tpu.matmul %0, %1, %cst {dimension_numbers = #tpu.dot_dimension_numbers<[1], [0], [0], [1], [0, 0, 1, 1], [], []>} : vector<8x4096xf32>, vector<4096x128xf32>, vector<8x128xf32> -> vector<8x128xf32>
    %c0_3 = arith.constant 0 : index
    %c0_4 = arith.constant 0 : index
    %3 = memref.load %arg3[%c0_3, %c0_4] : memref<1x1xf32, #tpu.memory_space<smem>>
    %4 = vector.broadcast %3 : f32 to vector<8x128xf32>
    %5 = arith.addf %2, %4 : vector<8x128xf32>
    %c0_5 = arith.constant 0 : index
    %c0_6 = arith.constant 0 : index
    %6 = vector.load %arg4[%c0_5, %c0_6] : memref<8x128xf32, #tpu.memory_space<vmem>>, vector<8x128xf32>
    tpu.vector_store %arg4[%c0_5, %c0_6], %5 {strides = array<i32>} : memref<8x128xf32, #tpu.memory_space<vmem>>, vector<8x128xf32>,
    return
  }
  func.func @transform_0(%arg0: i32) -> (i32, i32) {
    %c0_i32 = arith.constant 0 : i32
    %c0_i32_0 = arith.constant 0 : i32
    return %arg0, %c0_i32 : i32, i32
  }
  func.func @transform_1(%arg0: i32) -> (i32, i32) {
    %c0_i32 = arith.constant 0 : i32
    %c0_i32_0 = arith.constant 0 : i32
    %c0_i32_1 = arith.constant 0 : i32
    return %c0_i32, %c0_i32_0 : i32, i32
  }
  func.func @transform_2(%arg0: i32) -> (i32, i32) {
    %c0_i32 = arith.constant 0 : i32
    %c0_i32_0 = arith.constant 0 : i32
    %c0_i32_1 = arith.constant 0 : i32
    return %c0_i32, %c0_i32_0 : i32, i32
  }
  func.func @transform_3(%arg0: i32) -> (i32, i32) {
    %c0_i32 = arith.constant 0 : i32
    %c0_i32_0 = arith.constant 0 : i32
    return %arg0, %c0_i32 : i32, i32
  }
}

</mosaic_0001>

<llo_original>
// kernel: policy_forward.1
$region0: #{policy_forward.1}
  #allocation0 [shape = 'u32[]', space=smem, size = 0x4, offset = 0x4, fixed_abs, tag = 'smem constant byte address 0x4 - core index']
  #allocation1 [shape = 'u32[72,128]{1,0:T(1,128)}', space=vmem, size = 0x9000, scoped, tag = 'internal scratch']
  #allocation2 [shape = 'f32[1,1]{1,0:T(1,128)S(6)}', space=smem, size = 0x200, scoped, tag = 'scoped memory for policy_forward.1']
  %s0 = inlined_call_operand.vmem [shape: f32[8,4096], index: 0, kind: input, shape index: {}]
  %s1 = inlined_call_operand.vmem [shape: f32[4096,128], index: 1, kind: input, shape index: {}]
  %s2 = inlined_call_operand.<no memory space> [shape: f32[1,1], index: 2, kind: input, shape index: {}]
  %s3 = inlined_call_operand.vmem [shape: f32[8,128], index: 3, kind: output, shape index: {}]
  %s4 = sld [smem:[#allocation0]]
  $region22: #{policy_forward.1} parent=0
    _
  %s6 = ssub.s32 1, %s4
  %s7 = scalar_select 0, %s6, %s4
  %8 = sst [smem:[#allocation2]] %s2
  // Predicated region
  $region2: #{policy_forward.1} parent=0 // pred_check
    _
  $region3: #{policy_forward.1} parent=0 // pred_check_branch
    %10 = sbr.rel (0) target = $region5
  $region4: #{policy_forward.1} parent=0 // pred_region
    _
  $region5: #{policy_forward.1} parent=0 // pred_fallthru
    _
  // Predicated region
  $region6: #{policy_forward.1} parent=0 // pred_check
    _
  $region7: #{policy_forward.1} parent=0 // pred_check_branch
    %12 = sbr.rel (0) target = $region9
  $region8: #{policy_forward.1} parent=0 // pred_region
    _
  $region9: #{policy_forward.1} parent=0 // pred_fallthru
    _
  // Predicated region
  $region10: #{policy_forward.1} parent=0 // pred_check
    _
  $region11: #{policy_forward.1} parent=0 // pred_check_branch
    %14 = sbr.rel (0) target = $region13
  $region12: #{policy_forward.1} parent=0 // pred_region
    _
  $region13: #{policy_forward.1} parent=0 // pred_fallthru
    _
  %v15 = vld [vmem:[%s0] sm:$0xff]
  %v16 = vld [vmem:[%s0 + $0x8] sm:$0xff]
  %v17 = vld [vmem:[%s0 + $0x10] sm:$0xff]
  %v18 = vld [vmem:[%s0 + $0x18] sm:$0xff]
  %v19 = vld [vmem:[%s0 + $0x20] sm:$0xff]
  %v20 = vld [vmem:[%s0 + $0x28] sm:$0xff]
  %v21 = vld [vmem:[%s0 + $0x30] sm:$0xff]
  %v22 = vld [vmem:[%s0 + $0x38] sm:$0xff]
  %v23 = vld [vmem:[%s0 + $0x40] sm:$0xff]
  %v24 = vld [vmem:[%s0 + $0x48] sm:$0xff]
  %v25 = vld [vmem:[%s0 + $0x50] sm:$0xff]
  %v26 = vld [vmem:[%s0 + $0x58] sm:$0xff]
  %v27 = vld [vmem:[%s0 + $0x60] sm:$0xff]
  %v28 = vld [vmem:[%s0 + $0x68] sm:$0xff]
  %v29 = vld [vmem:[%s0 + $0x70] sm:$0xff]
  %v30 = vld [vmem:[%s0 + $0x78] sm:$0xff]
  %v31 = vld [vmem:[%s0 + $0x80] sm:$0xff]
  %v32 = vld [vmem:[%s0 + $0x88] sm:$0xff]
  %v33 = vld [vmem:[%s0 + $0x90] sm:$0xff]
  %v34 = vld [vmem:[%s0 + $0x98] sm:$0xff]
  %v35 = vld [vmem:[%s0 + $0xa0] sm:$0xff]
  %v36 = vld [vmem:[%s0 + $0xa8] sm:$0xff]
  %v37 = vld [vmem:[%s0 + $0xb0] sm:$0xff]
  %v38 = vld [vmem:[%s0 + $0xb8] sm:$0xff]
  %v39 = vld [vmem:[%s0 + $0xc0] sm:$0xff]
  %v40 = vld [vmem:[%s0 + $0xc8] sm:$0xff]
  %v41 = vld [vmem:[%s0 + $0xd0] sm:$0xff]
  %v42 = vld [vmem:[%s0 + $0xd8] sm:$0xff]
  %v43 = vld [vmem:[%s0 + $0xe0] sm:$0xff]
  %v44 = vld [vmem:[%s0 + $0xe8] sm:$0xff]
  %v45 = vld [vmem:[%s0 + $0xf0] sm:$0xff]
  %v46 = vld [vmem:[%s0 + $0xf8] sm:$0xff]
  %v47 = vld [vmem:[%s1] sm:$0xff]
  %v48 = vld [vmem:[%s1 + $0x8] sm:$0xff]
  %v49 = vld [vmem:[%s1 + $0x10] sm:$0xff]
  %v50 = vld [vmem:[%s1 + $0x18] sm:$0xff]
  %v51 = vld [vmem:[%s1 + $0x20] sm:$0xff]
  %v52 = vld [vmem:[%s1 + $0x28] sm:$0xff]
  %v53 = vld [vmem:[%s1 + $0x30] sm:$0xff]
  %v54 = vld [vmem:[%s1 + $0x38] sm:$0xff]
  %v55 = vld [vmem:[%s1 + $0x40] sm:$0xff]
  %v56 = vld [vmem:[%s1 + $0x48] sm:$0xff]
  %v57 = vld [vmem:[%s1 + $0x50] sm:$0xff]
  %v58 = vld [vmem:[%s1 + $0x58] sm:$0xff]
  %v59 = vld [vmem:[%s1 + $0x60] sm:$0xff]
  %v60 = vld [vmem:[%s1 + $0x68] sm:$0xff]
  %v61 = vld [vmem:[%s1 + $0x70] sm:$0xff]
  %v62 = vld [vmem:[%s1 + $0x78] sm:$0xff]
  %v63 = vld [vmem:[%s1 + $0x80] sm:$0xff]
  %v64 = vld [vmem:[%s1 + $0x88] sm:$0xff]
  %v65 = vld [vmem:[%s1 + $0x90] sm:$0xff]
  %v66 = vld [vmem:[%s1 + $0x98] sm:$0xff]
  %v67 = vld [vmem:[%s1 + $0xa0] sm:$0xff]
  %v68 = vld [vmem:[%s1 + $0xa8] sm:$0xff]
  %v69 = vld [vmem:[%s1 + $0xb0] sm:$0xff]
  %v70 = vld [vmem:[%s1 + $0xb8] sm:$0xff]
  %v71 = vld [vmem:[%s1 + $0xc0] sm:$0xff]
  %v72 = vld [vmem:[%s1 + $0xc8] sm:$0xff]
  %v73 = vld [vmem:[%s1 + $0xd0] sm:$0xff]
  %v74 = vld [vmem:[%s1 + $0xd8] sm:$0xff]
  %v75 = vld [vmem:[%s1 + $0xe0] sm:$0xff]
  %v76 = vld [vmem:[%s1 + $0xe8] sm:$0xff]
  %v77 = vld [vmem:[%s1 + $0xf0] sm:$0xff]
  %v78 = vld [vmem:[%s1 + $0xf8] sm:$0xff]
  %v79 = vld [vmem:[%s1 + $0x100] sm:$0xff]
  %v80 = vld [vmem:[%s1 + $0x108] sm:$0xff]
  %v81 = vld [vmem:[%s1 + $0x110] sm:$0xff]
  %v82 = vld [vmem:[%s1 + $0x118] sm:$0xff]
  %v83 = vld [vmem:[%s1 + $0x120] sm:$0xff]
  %v84 = vld [vmem:[%s1 + $0x128] sm:$0xff]
  %v85 = vld [vmem:[%s1 + $0x130] sm:$0xff]
  %v86 = vld [vmem:[%s1 + $0x138] sm:$0xff]
  %v87 = vld [vmem:[%s1 + $0x140] sm:$0xff]
  %v88 = vld [vmem:[%s1 + $0x148] sm:$0xff]
  %v89 = vld [vmem:[%s1 + $0x150] sm:$0xff]
  %v90 = vld [vmem:[%s1 + $0x158] sm:$0xff]
  %v91 = vld [vmem:[%s1 + $0x160] sm:$0xff]
  %v92 = vld [vmem:[%s1 + $0x168] sm:$0xff]
  %v93 = vld [vmem:[%s1 + $0x170] sm:$0xff]
  %v94 = vld [vmem:[%s1 + $0x178] sm:$0xff]
  %v95 = vld [vmem:[%s1 + $0x180] sm:$0xff]
  %v96 = vld [vmem:[%s1 + $0x188] sm:$0xff]
  %v97 = vld [vmem:[%s1 + $0x190] sm:$0xff]
  %v98 = vld [vmem:[%s1 + $0x198] sm:$0xff]
  %v99 = vld [vmem:[%s1 + $0x1a0] sm:$0xff]
  %v100 = vld [vmem:[%s1 + $0x1a8] sm:$0xff]
  %v101 = vld [vmem:[%s1 + $0x1b0] sm:$0xff]
  %v102 = vld [vmem:[%s1 + $0x1b8] sm:$0xff]
  %v103 = vld [vmem:[%s1 + $0x1c0] sm:$0xff]
  %v104 = vld [vmem:[%s1 + $0x1c8] sm:$0xff]
  %v105 = vld [vmem:[%s1 + $0x1d0] sm:$0xff]
  %v106 = vld [vmem:[%s1 + $0x1d8] sm:$0xff]
  %v107 = vld [vmem:[%s1 + $0x1e0] sm:$0xff]
  %v108 = vld [vmem:[%s1 + $0x1e8] sm:$0xff]
  %v109 = vld [vmem:[%s1 + $0x1f0] sm:$0xff]
  %v110 = vld [vmem:[%s1 + $0x1f8] sm:$0xff]
  %v111 = vld [vmem:[%s1 + $0x200] sm:$0xff]
  %v112 = vld [vmem:[%s1 + $0x208] sm:$0xff]
  %v113 = vld [vmem:[%s1 + $0x210] sm:$0xff]
  %v114 = vld [vmem:[%s1 + $0x218] sm:$0xff]
  %v115 = vld [vmem:[%s1 + $0x220] sm:$0xff]
  %v116 = vld [vmem:[%s1 + $0x228] sm:$0xff]
  %v117 = vld [vmem:[%s1 + $0x230] sm:$0xff]
  %v118 = vld [vmem:[%s1 + $0x238] sm:$0xff]
  %v119 = vld [vmem:[%s1 + $0x240] sm:$0xff]
  %v120 = vld [vmem:[%s1 + $0x248] sm:$0xff]
  %v121 = vld [vmem:[%s1 + $0x250] sm:$0xff]
  %v122 = vld [vmem:[%s1 + $0x258] sm:$0xff]
  %v123 = vld [vmem:[%s1 + $0x260] sm:$0xff]
  %v124 = vld [vmem:[%s1 + $0x268] sm:$0xff]
  %v125 = vld [vmem:[%s1 + $0x270] sm:$0xff]
  %v126 = vld [vmem:[%s1 + $0x278] sm:$0xff]
  %v127 = vld [vmem:[%s1 + $0x280] sm:$0xff]
  %v128 = vld [vmem:[%s1 + $0x288] sm:$0xff]
  %v129 = vld [vmem:[%s1 + $0x290] sm:$0xff]
  %v130 = vld [vmem:[%s1 + $0x298] sm:$0xff]
  %v131 = vld [vmem:[%s1 + $0x2a0] sm:$0xff]
  %v132 = vld [vmem:[%s1 + $0x2a8] sm:$0xff]
  %v133 = vld [vmem:[%s1 + $0x2b0] sm:$0xff]
  %v134 = vld [vmem:[%s1 + $0x2b8] sm:$0xff]
  %v135 = vld [vmem:[%s1 + $0x2c0] sm:$0xff]
  %v136 = vld [vmem:[%s1 + $0x2c8] sm:$0xff]
  %v137 = vld [vmem:[%s1 + $0x2d0] sm:$0xff]
  %v138 = vld [vmem:[%s1 + $0x2d8] sm:$0xff]
  %v139 = vld [vmem:[%s1 + $0x2e0] sm:$0xff]
  %v140 = vld [vmem:[%s1 + $0x2e8] sm:$0xff]
  %v141 = vld [vmem:[%s1 + $0x2f0] sm:$0xff]
  %v142 = vld [vmem:[%s1 + $0x2f8] sm:$0xff]
  %v143 = vld [vmem:[%s1 + $0x300] sm:$0xff]
  %v144 = vld [vmem:[%s1 + $0x308] sm:$0xff]
  %v145 = vld [vmem:[%s1 + $0x310] sm:$0xff]
  %v146 = vld [vmem:[%s1 + $0x318] sm:$0xff]
  %v147 = vld [vmem:[%s1 + $0x320] sm:$0xff]
  %v148 = vld [vmem:[%s1 + $0x328] sm:$0xff]
  %v149 = vld [vmem:[%s1 + $0x330] sm:$0xff]
  %v150 = vld [vmem:[%s1 + $0x338] sm:$0xff]
  %v151 = vld [vmem:[%s1 + $0x340] sm:$0xff]
  %v152 = vld [vmem:[%s1 + $0x348] sm:$0xff]
  %v153 = vld [vmem:[%s1 + $0x350] sm:$0xff]
  %v154 = vld [vmem:[%s1 + $0x358] sm:$0xff]
  %v155 = vld [vmem:[%s1 + $0x360] sm:$0xff]
  %v156 = vld [vmem:[%s1 + $0x368] sm:$0xff]
  %v157 = vld [vmem:[%s1 + $0x370] sm:$0xff]
  %v158 = vld [vmem:[%s1 + $0x378] sm:$0xff]
  %v159 = vld [vmem:[%s1 + $0x380] sm:$0xff]
  %v160 = vld [vmem:[%s1 + $0x388] sm:$0xff]
  %v161 = vld [vmem:[%s1 + $0x390] sm:$0xff]
  %v162 = vld [vmem:[%s1 + $0x398] sm:$0xff]
  %v163 = vld [vmem:[%s1 + $0x3a0] sm:$0xff]
  %v164 = vld [vmem:[%s1 + $0x3a8] sm:$0xff]
  %v165 = vld [vmem:[%s1 + $0x3b0] sm:$0xff]
  %v166 = vld [vmem:[%s1 + $0x3b8] sm:$0xff]
  %v167 = vld [vmem:[%s1 + $0x3c0] sm:$0xff]
  %v168 = vld [vmem:[%s1 + $0x3c8] sm:$0xff]
  %v169 = vld [vmem:[%s1 + $0x3d0] sm:$0xff]
  %v170 = vld [vmem:[%s1 + $0x3d8] sm:$0xff]
  %v171 = vld [vmem:[%s1 + $0x3e0] sm:$0xff]
  %v172 = vld [vmem:[%s1 + $0x3e8] sm:$0xff]
  %v173 = vld [vmem:[%s1 + $0x3f0] sm:$0xff]
  %v174 = vld [vmem:[%s1 + $0x3f8] sm:$0xff]
  %v175 = vld [vmem:[%s1 + $0x400] sm:$0xff]
  %v176 = vld [vmem:[%s1 + $0x408] sm:$0xff]
  %v177 = vld [vmem:[%s1 + $0x410] sm:$0xff]
  %v178 = vld [vmem:[%s1 + $0x418] sm:$0xff]
  %v179 = vld [vmem:[%s1 + $0x420] sm:$0xff]
  %v180 = vld [vmem:[%s1 + $0x428] sm:$0xff]
  %v181 = vld [vmem:[%s1 + $0x430] sm:$0xff]
  %v182 = vld [vmem:[%s1 + $0x438] sm:$0xff]
  %v183 = vld [vmem:[%s1 + $0x440] sm:$0xff]
  %v184 = vld [vmem:[%s1 + $0x448] sm:$0xff]
  %v185 = vld [vmem:[%s1 + $0x450] sm:$0xff]
  %v186 = vld [vmem:[%s1 + $0x458] sm:$0xff]
  %v187 = vld [vmem:[%s1 + $0x460] sm:$0xff]
  %v188 = vld [vmem:[%s1 + $0x468] sm:$0xff]
  %v189 = vld [vmem:[%s1 + $0x470] sm:$0xff]
  %v190 = vld [vmem:[%s1 + $0x478] sm:$0xff]
  %v191 = vld [vmem:[%s1 + $0x480] sm:$0xff]
  %v192 = vld [vmem:[%s1 + $0x488] sm:$0xff]
  %v193 = vld [vmem:[%s1 + $0x490] sm:$0xff]
  %v194 = vld [vmem:[%s1 + $0x498] sm:$0xff]
  %v195 = vld [vmem:[%s1 + $0x4a0] sm:$0xff]
  %v196 = vld [vmem:[%s1 + $0x4a8] sm:$0xff]
  %v197 = vld [vmem:[%s1 + $0x4b0] sm:$0xff]
  %v198 = vld [vmem:[%s1 + $0x4b8] sm:$0xff]
  %v199 = vld [vmem:[%s1 + $0x4c0] sm:$0xff]
  %v200 = vld [vmem:[%s1 + $0x4c8] sm:$0xff]
  %v201 = vld [vmem:[%s1 + $0x4d0] sm:$0xff]
  %v202 = vld [vmem:[%s1 + $0x4d8] sm:$0xff]
  %v203 = vld [vmem:[%s1 + $0x4e0] sm:$0xff]
  %v204 = vld [vmem:[%s1 + $0x4e8] sm:$0xff]
  %v205 = vld [vmem:[%s1 + $0x4f0] sm:$0xff]
  %v206 = vld [vmem:[%s1 + $0x4f8] sm:$0xff]
  %v207 = vld [vmem:[%s1 + $0x500] sm:$0xff]
  %v208 = vld [vmem:[%s1 + $0x508] sm:$0xff]
  %v209 = vld [vmem:[%s1 + $0x510] sm:$0xff]
  %v210 = vld [vmem:[%s1 + $0x518] sm:$0xff]
  %v211 = vld [vmem:[%s1 + $0x520] sm:$0xff]
  %v212 = vld [vmem:[%s1 + $0x528] sm:$0xff]
  %v213 = vld [vmem:[%s1 + $0x530] sm:$0xff]
  %v214 = vld [vmem:[%s1 + $0x538] sm:$0xff]
  %v215 = vld [vmem:[%s1 + $0x540] sm:$0xff]
  %v216 = vld [vmem:[%s1 + $0x548] sm:$0xff]
  %v217 = vld [vmem:[%s1 + $0x550] sm:$0xff]
  %v218 = vld [vmem:[%s1 + $0x558] sm:$0xff]
  %v219 = vld [vmem:[%s1 + $0x560] sm:$0xff]
  %v220 = vld [vmem:[%s1 + $0x568] sm:$0xff]
  %v221 = vld [vmem:[%s1 + $0x570] sm:$0xff]
  %v222 = vld [vmem:[%s1 + $0x578] sm:$0xff]
  %v223 = vld [vmem:[%s1 + $0x580] sm:$0xff]
  %v224 = vld [vmem:[%s1 + $0x588] sm:$0xff]
  %v225 = vld [vmem:[%s1 + $0x590] sm:$0xff]
  %v226 = vld [vmem:[%s1 + $0x598] sm:$0xff]
  %v227 = vld [vmem:[%s1 + $0x5a0] sm:$0xff]
  %v228 = vld [vmem:[%s1 + $0x5a8] sm:$0xff]
  %v229 = vld [vmem:[%s1 + $0x5b0] sm:$0xff]
  %v230 = vld [vmem:[%s1 + $0x5b8] sm:$0xff]
  %v231 = vld [vmem:[%s1 + $0x5c0] sm:$0xff]
  %v232 = vld [vmem:[%s1 + $0x5c8] sm:$0xff]
  %v233 = vld [vmem:[%s1 + $0x5d0] sm:$0xff]
  %v234 = vld [vmem:[%s1 + $0x5d8] sm:$0xff]
  %v235 = vld [vmem:[%s1 + $0x5e0] sm:$0xff]
  %v236 = vld [vmem:[%s1 + $0x5e8] sm:$0xff]
  %v237 = vld [vmem:[%s1 + $0x5f0] sm:$0xff]
  %v238 = vld [vmem:[%s1 + $0x5f8] sm:$0xff]
  %v239 = vld [vmem:[%s1 + $0x600] sm:$0xff]
  %v240 = vld [vmem:[%s1 + $0x608] sm:$0xff]
  %v241 = vld [vmem:[%s1 + $0x610] sm:$0xff]
  %v242 = vld [vmem:[%s1 + $0x618] sm:$0xff]
  %v243 = vld [vmem:[%s1 + $0x620] sm:$0xff]
  %v244 = vld [vmem:[%s1 + $0x628] sm:$0xff]
  %v245 = vld [vmem:[%s1 + $0x630] sm:$0xff]
  %v246 = vld [vmem:[%s1 + $0x638] sm:$0xff]
  %v247 = vld [vmem:[%s1 + $0x640] sm:$0xff]
  %v248 = vld [vmem:[%s1 + $0x648] sm:$0xff]
  %v249 = vld [vmem:[%s1 + $0x650] sm:$0xff]
  %v250 = vld [vmem:[%s1 + $0x658] sm:$0xff]
  %v251 = vld [vmem:[%s1 + $0x660] sm:$0xff]
  %v252 = vld [vmem:[%s1 + $0x668] sm:$0xff]
  %v253 = vld [vmem:[%s1 + $0x670] sm:$0xff]
  %v254 = vld [vmem:[%s1 + $0x678] sm:$0xff]
  %v255 = vld [vmem:[%s1 + $0x680] sm:$0xff]
  %v256 = vld [vmem:[%s1 + $0x688] sm:$0xff]
  %v257 = vld [vmem:[%s1 + $0x690] sm:$0xff]
  %v258 = vld [vmem:[%s1 + $0x698] sm:$0xff]
  %v259 = vld [vmem:[%s1 + $0x6a0] sm:$0xff]
  %v260 = vld [vmem:[%s1 + $0x6a8] sm:$0xff]
  %v261 = vld [vmem:[%s1 + $0x6b0] sm:$0xff]
  %v262 = vld [vmem:[%s1 + $0x6b8] sm:$0xff]
  %v263 = vld [vmem:[%s1 + $0x6c0] sm:$0xff]
  %v264 = vld [vmem:[%s1 + $0x6c8] sm:$0xff]
  %v265 = vld [vmem:[%s1 + $0x6d0] sm:$0xff]
  %v266 = vld [vmem:[%s1 + $0x6d8] sm:$0xff]
  %v267 = vld [vmem:[%s1 + $0x6e0] sm:$0xff]
  %v268 = vld [vmem:[%s1 + $0x6e8] sm:$0xff]
  %v269 = vld [vmem:[%s1 + $0x6f0] sm:$0xff]
  %v270 = vld [vmem:[%s1 + $0x6f8] sm:$0xff]
  %v271 = vld [vmem:[%s1 + $0x700] sm:$0xff]
  %v272 = vld [vmem:[%s1 + $0x708] sm:$0xff]
  %v273 = vld [vmem:[%s1 + $0x710] sm:$0xff]
  %v274 = vld [vmem:[%s1 + $0x718] sm:$0xff]
  %v275 = vld [vmem:[%s1 + $0x720] sm:$0xff]
  %v276 = vld [vmem:[%s1 + $0x728] sm:$0xff]
  %v277 = vld [vmem:[%s1 + $0x730] sm:$0xff]
  %v278 = vld [vmem:[%s1 + $0x738] sm:$0xff]
  %v279 = vld [vmem:[%s1 + $0x740] sm:$0xff]
  %v280 = vld [vmem:[%s1 + $0x748] sm:$0xff]
  %v281 = vld [vmem:[%s1 + $0x750] sm:$0xff]
  %v282 = vld [vmem:[%s1 + $0x758] sm:$0xff]
  %v283 = vld [vmem:[%s1 + $0x760] sm:$0xff]
  %v284 = vld [vmem:[%s1 + $0x768] sm:$0xff]
  %v285 = vld [vmem:[%s1 + $0x770] sm:$0xff]
  %v286 = vld [vmem:[%s1 + $0x778] sm:$0xff]
  %v287 = vld [vmem:[%s1 + $0x780] sm:$0xff]
  %v288 = vld [vmem:[%s1 + $0x788] sm:$0xff]
  %v289 = vld [vmem:[%s1 + $0x790] sm:$0xff]
  %v290 = vld [vmem:[%s1 + $0x798] sm:$0xff]
  %v291 = vld [vmem:[%s1 + $0x7a0] sm:$0xff]
  %v292 = vld [vmem:[%s1 + $0x7a8] sm:$0xff]
  %v293 = vld [vmem:[%s1 + $0x7b0] sm:$0xff]
  %v294 = vld [vmem:[%s1 + $0x7b8] sm:$0xff]
  %v295 = vld [vmem:[%s1 + $0x7c0] sm:$0xff]
  %v296 = vld [vmem:[%s1 + $0x7c8] sm:$0xff]
  %v297 = vld [vmem:[%s1 + $0x7d0] sm:$0xff]
  %v298 = vld [vmem:[%s1 + $0x7d8] sm:$0xff]
  %v299 = vld [vmem:[%s1 + $0x7e0] sm:$0xff]
  %v300 = vld [vmem:[%s1 + $0x7e8] sm:$0xff]
  %v301 = vld [vmem:[%s1 + $0x7f0] sm:$0xff]
  %v302 = vld [vmem:[%s1 + $0x7f8] sm:$0xff]
  %v303 = vld [vmem:[%s1 + $0x800] sm:$0xff]
  %v304 = vld [vmem:[%s1 + $0x808] sm:$0xff]
  %v305 = vld [vmem:[%s1 + $0x810] sm:$0xff]
  %v306 = vld [vmem:[%s1 + $0x818] sm:$0xff]
  %v307 = vld [vmem:[%s1 + $0x820] sm:$0xff]
  %v308 = vld [vmem:[%s1 + $0x828] sm:$0xff]
  %v309 = vld [vmem:[%s1 + $0x830] sm:$0xff]
  %v310 = vld [vmem:[%s1 + $0x838] sm:$0xff]
  %v311 = vld [vmem:[%s1 + $0x840] sm:$0xff]
  %v312 = vld [vmem:[%s1 + $0x848] sm:$0xff]
  %v313 = vld [vmem:[%s1 + $0x850] sm:$0xff]
  %v314 = vld [vmem:[%s1 + $0x858] sm:$0xff]
  %v315 = vld [vmem:[%s1 + $0x860] sm:$0xff]
  %v316 = vld [vmem:[%s1 + $0x868] sm:$0xff]
  %v317 = vld [vmem:[%s1 + $0x870] sm:$0xff]
  %v318 = vld [vmem:[%s1 + $0x878] sm:$0xff]
  %v319 = vld [vmem:[%s1 + $0x880] sm:$0xff]
  %v320 = vld [vmem:[%s1 + $0x888] sm:$0xff]
  %v321 = vld [vmem:[%s1 + $0x890] sm:$0xff]
  %v322 = vld [vmem:[%s1 + $0x898] sm:$0xff]
  %v323 = vld [vmem:[%s1 + $0x8a0] sm:$0xff]
  %v324 = vld [vmem:[%s1 + $0x8a8] sm:$0xff]
  %v325 = vld [vmem:[%s1 + $0x8b0] sm:$0xff]
  %v326 = vld [vmem:[%s1 + $0x8b8] sm:$0xff]
  %v327 = vld [vmem:[%s1 + $0x8c0] sm:$0xff]
  %v328 = vld [vmem:[%s1 + $0x8c8] sm:$0xff]
  %v329 = vld [vmem:[%s1 + $0x8d0] sm:$0xff]
  %v330 = vld [vmem:[%s1 + $0x8d8] sm:$0xff]
  %v331 = vld [vmem:[%s1 + $0x8e0] sm:$0xff]
  %v332 = vld [vmem:[%s1 + $0x8e8] sm:$0xff]
  %v333 = vld [vmem:[%s1 + $0x8f0] sm:$0xff]
  %v334 = vld [vmem:[%s1 + $0x8f8] sm:$0xff]
  %v335 = vld [vmem:[%s1 + $0x900] sm:$0xff]
  %v336 = vld [vmem:[%s1 + $0x908] sm:$0xff]
  %v337 = vld [vmem:[%s1 + $0x910] sm:$0xff]
  %v338 = vld [vmem:[%s1 + $0x918] sm:$0xff]
  %v339 = vld [vmem:[%s1 + $0x920] sm:$0xff]
  %v340 = vld [vmem:[%s1 + $0x928] sm:$0xff]
  %v341 = vld [vmem:[%s1 + $0x930] sm:$0xff]
  %v342 = vld [vmem:[%s1 + $0x938] sm:$0xff]
  %v343 = vld [vmem:[%s1 + $0x940] sm:$0xff]
  %v344 = vld [vmem:[%s1 + $0x948] sm:$0xff]
  %v345 = vld [vmem:[%s1 + $0x950] sm:$0xff]
  %v346 = vld [vmem:[%s1 + $0x958] sm:$0xff]
  %v347 = vld [vmem:[%s1 + $0x960] sm:$0xff]
  %v348 = vld [vmem:[%s1 + $0x968] sm:$0xff]
  %v349 = vld [vmem:[%s1 + $0x970] sm:$0xff]
  %v350 = vld [vmem:[%s1 + $0x978] sm:$0xff]
  %v351 = vld [vmem:[%s1 + $0x980] sm:$0xff]
  %v352 = vld [vmem:[%s1 + $0x988] sm:$0xff]
  %v353 = vld [vmem:[%s1 + $0x990] sm:$0xff]
  %v354 = vld [vmem:[%s1 + $0x998] sm:$0xff]
  %v355 = vld [vmem:[%s1 + $0x9a0] sm:$0xff]
  %v356 = vld [vmem:[%s1 + $0x9a8] sm:$0xff]
  %v357 = vld [vmem:[%s1 + $0x9b0] sm:$0xff]
  %v358 = vld [vmem:[%s1 + $0x9b8] sm:$0xff]
  %v359 = vld [vmem:[%s1 + $0x9c0] sm:$0xff]
  %v360 = vld [vmem:[%s1 + $0x9c8] sm:$0xff]
  %v361 = vld [vmem:[%s1 + $0x9d0] sm:$0xff]
  %v362 = vld [vmem:[%s1 + $0x9d8] sm:$0xff]
  %v363 = vld [vmem:[%s1 + $0x9e0] sm:$0xff]
  %v364 = vld [vmem:[%s1 + $0x9e8] sm:$0xff]
  %v365 = vld [vmem:[%s1 + $0x9f0] sm:$0xff]
  %v366 = vld [vmem:[%s1 + $0x9f8] sm:$0xff]
  %v367 = vld [vmem:[%s1 + $0xa00] sm:$0xff]
  %v368 = vld [vmem:[%s1 + $0xa08] sm:$0xff]
  %v369 = vld [vmem:[%s1 + $0xa10] sm:$0xff]
  %v370 = vld [vmem:[%s1 + $0xa18] sm:$0xff]
  %v371 = vld [vmem:[%s1 + $0xa20] sm:$0xff]
  %v372 = vld [vmem:[%s1 + $0xa28] sm:$0xff]
  %v373 = vld [vmem:[%s1 + $0xa30] sm:$0xff]
  %v374 = vld [vmem:[%s1 + $0xa38] sm:$0xff]
  %v375 = vld [vmem:[%s1 + $0xa40] sm:$0xff]
  %v376 = vld [vmem:[%s1 + $0xa48] sm:$0xff]
  %v377 = vld [vmem:[%s1 + $0xa50] sm:$0xff]
  %v378 = vld [vmem:[%s1 + $0xa58] sm:$0xff]
  %v379 = vld [vmem:[%s1 + $0xa60] sm:$0xff]
  %v380 = vld [vmem:[%s1 + $0xa68] sm:$0xff]
  %v381 = vld [vmem:[%s1 + $0xa70] sm:$0xff]
  %v382 = vld [vmem:[%s1 + $0xa78] sm:$0xff]
  %v383 = vld [vmem:[%s1 + $0xa80] sm:$0xff]
  %v384 = vld [vmem:[%s1 + $0xa88] sm:$0xff]
  %v385 = vld [vmem:[%s1 + $0xa90] sm:$0xff]
  %v386 = vld [vmem:[%s1 + $0xa98] sm:$0xff]
  %v387 = vld [vmem:[%s1 + $0xaa0] sm:$0xff]
  %v388 = vld [vmem:[%s1 + $0xaa8] sm:$0xff]
  %v389 = vld [vmem:[%s1 + $0xab0] sm:$0xff]
  %v390 = vld [vmem:[%s1 + $0xab8] sm:$0xff]
  %v391 = vld [vmem:[%s1 + $0xac0] sm:$0xff]
  %v392 = vld [vmem:[%s1 + $0xac8] sm:$0xff]
  %v393 = vld [vmem:[%s1 + $0xad0] sm:$0xff]
  %v394 = vld [vmem:[%s1 + $0xad8] sm:$0xff]
  %v395 = vld [vmem:[%s1 + $0xae0] sm:$0xff]
  %v396 = vld [vmem:[%s1 + $0xae8] sm:$0xff]
  %v397 = vld [vmem:[%s1 + $0xaf0] sm:$0xff]
  %v398 = vld [vmem:[%s1 + $0xaf8] sm:$0xff]
  %v399 = vld [vmem:[%s1 + $0xb00] sm:$0xff]
  %v400 = vld [vmem:[%s1 + $0xb08] sm:$0xff]
  %v401 = vld [vmem:[%s1 + $0xb10] sm:$0xff]
  %v402 = vld [vmem:[%s1 + $0xb18] sm:$0xff]
  %v403 = vld [vmem:[%s1 + $0xb20] sm:$0xff]
  %v404 = vld [vmem:[%s1 + $0xb28] sm:$0xff]
  %v405 = vld [vmem:[%s1 + $0xb30] sm:$0xff]
  %v406 = vld [vmem:[%s1 + $0xb38] sm:$0xff]
  %v407 = vld [vmem:[%s1 + $0xb40] sm:$0xff]
  %v408 = vld [vmem:[%s1 + $0xb48] sm:$0xff]
  %v409 = vld [vmem:[%s1 + $0xb50] sm:$0xff]
  %v410 = vld [vmem:[%s1 + $0xb58] sm:$0xff]
  %v411 = vld [vmem:[%s1 + $0xb60] sm:$0xff]
  %v412 = vld [vmem:[%s1 + $0xb68] sm:$0xff]
  %v413 = vld [vmem:[%s1 + $0xb70] sm:$0xff]
  %v414 = vld [vmem:[%s1 + $0xb78] sm:$0xff]
  %v415 = vld [vmem:[%s1 + $0xb80] sm:$0xff]
  %v416 = vld [vmem:[%s1 + $0xb88] sm:$0xff]
  %v417 = vld [vmem:[%s1 + $0xb90] sm:$0xff]
  %v418 = vld [vmem:[%s1 + $0xb98] sm:$0xff]
  %v419 = vld [vmem:[%s1 + $0xba0] sm:$0xff]
  %v420 = vld [vmem:[%s1 + $0xba8] sm:$0xff]
  %v421 = vld [vmem:[%s1 + $0xbb0] sm:$0xff]
  %v422 = vld [vmem:[%s1 + $0xbb8] sm:$0xff]
  %v423 = vld [vmem:[%s1 + $0xbc0] sm:$0xff]
  %v424 = vld [vmem:[%s1 + $0xbc8] sm:$0xff]
  %v425 = vld [vmem:[%s1 + $0xbd0] sm:$0xff]
  %v426 = vld [vmem:[%s1 + $0xbd8] sm:$0xff]
  %v427 = vld [vmem:[%s1 + $0xbe0] sm:$0xff]
  %v428 = vld [vmem:[%s1 + $0xbe8] sm:$0xff]
  %v429 = vld [vmem:[%s1 + $0xbf0] sm:$0xff]
  %v430 = vld [vmem:[%s1 + $0xbf8] sm:$0xff]
  %v431 = vld [vmem:[%s1 + $0xc00] sm:$0xff]
  %v432 = vld [vmem:[%s1 + $0xc08] sm:$0xff]
  %v433 = vld [vmem:[%s1 + $0xc10] sm:$0xff]
  %v434 = vld [vmem:[%s1 + $0xc18] sm:$0xff]
  %v435 = vld [vmem:[%s1 + $0xc20] sm:$0xff]
  %v436 = vld [vmem:[%s1 + $0xc28] sm:$0xff]
  %v437 = vld [vmem:[%s1 + $0xc30] sm:$0xff]
  %v438 = vld [vmem:[%s1 + $0xc38] sm:$0xff]
  %v439 = vld [vmem:[%s1 + $0xc40] sm:$0xff]
  %v440 = vld [vmem:[%s1 + $0xc48] sm:$0xff]
  %v441 = vld [vmem:[%s1 + $0xc50] sm:$0xff]
  %v442 = vld [vmem:[%s1 + $0xc58] sm:$0xff]
  %v443 = vld [vmem:[%s1 + $0xc60] sm:$0xff]
  %v444 = vld [vmem:[%s1 + $0xc68] sm:$0xff]
  %v445 = vld [vmem:[%s1 + $0xc70] sm:$0xff]
  %v446 = vld [vmem:[%s1 + $0xc78] sm:$0xff]
  %v447 = vld [vmem:[%s1 + $0xc80] sm:$0xff]
  %v448 = vld [vmem:[%s1 + $0xc88] sm:$0xff]
  %v449 = vld [vmem:[%s1 + $0xc90] sm:$0xff]
  %v450 = vld [vmem:[%s1 + $0xc98] sm:$0xff]
  %v451 = vld [vmem:[%s1 + $0xca0] sm:$0xff]
  %v452 = vld [vmem:[%s1 + $0xca8] sm:$0xff]
  %v453 = vld [vmem:[%s1 + $0xcb0] sm:$0xff]
  %v454 = vld [vmem:[%s1 + $0xcb8] sm:$0xff]
  %v455 = vld [vmem:[%s1 + $0xcc0] sm:$0xff]
  %v456 = vld [vmem:[%s1 + $0xcc8] sm:$0xff]
  %v457 = vld [vmem:[%s1 + $0xcd0] sm:$0xff]
  %v458 = vld [vmem:[%s1 + $0xcd8] sm:$0xff]
  %v459 = vld [vmem:[%s1 + $0xce0] sm:$0xff]
  %v460 = vld [vmem:[%s1 + $0xce8] sm:$0xff]
  %v461 = vld [vmem:[%s1 + $0xcf0] sm:$0xff]
  %v462 = vld [vmem:[%s1 + $0xcf8] sm:$0xff]
  %v463 = vld [vmem:[%s1 + $0xd00] sm:$0xff]
  %v464 = vld [vmem:[%s1 + $0xd08] sm:$0xff]
  %v465 = vld [vmem:[%s1 + $0xd10] sm:$0xff]
  %v466 = vld [vmem:[%s1 + $0xd18] sm:$0xff]
  %v467 = vld [vmem:[%s1 + $0xd20] sm:$0xff]
  %v468 = vld [vmem:[%s1 + $0xd28] sm:$0xff]
  %v469 = vld [vmem:[%s1 + $0xd30] sm:$0xff]
  %v470 = vld [vmem:[%s1 + $0xd38] sm:$0xff]
  %v471 = vld [vmem:[%s1 + $0xd40] sm:$0xff]
  %v472 = vld [vmem:[%s1 + $0xd48] sm:$0xff]
  %v473 = vld [vmem:[%s1 + $0xd50] sm:$0xff]
  %v474 = vld [vmem:[%s1 + $0xd58] sm:$0xff]
  %v475 = vld [vmem:[%s1 + $0xd60] sm:$0xff]
  %v476 = vld [vmem:[%s1 + $0xd68] sm:$0xff]
  %v477 = vld [vmem:[%s1 + $0xd70] sm:$0xff]
  %v478 = vld [vmem:[%s1 + $0xd78] sm:$0xff]
  %v479 = vld [vmem:[%s1 + $0xd80] sm:$0xff]
  %v480 = vld [vmem:[%s1 + $0xd88] sm:$0xff]
  %v481 = vld [vmem:[%s1 + $0xd90] sm:$0xff]
  %v482 = vld [vmem:[%s1 + $0xd98] sm:$0xff]
  %v483 = vld [vmem:[%s1 + $0xda0] sm:$0xff]
  %v484 = vld [vmem:[%s1 + $0xda8] sm:$0xff]
  %v485 = vld [vmem:[%s1 + $0xdb0] sm:$0xff]
  %v486 = vld [vmem:[%s1 + $0xdb8] sm:$0xff]
  %v487 = vld [vmem:[%s1 + $0xdc0] sm:$0xff]
  %v488 = vld [vmem:[%s1 + $0xdc8] sm:$0xff]
  %v489 = vld [vmem:[%s1 + $0xdd0] sm:$0xff]
  %v490 = vld [vmem:[%s1 + $0xdd8] sm:$0xff]
  %v491 = vld [vmem:[%s1 + $0xde0] sm:$0xff]
  %v492 = vld [vmem:[%s1 + $0xde8] sm:$0xff]
  %v493 = vld [vmem:[%s1 + $0xdf0] sm:$0xff]
  %v494 = vld [vmem:[%s1 + $0xdf8] sm:$0xff]
  %v495 = vld [vmem:[%s1 + $0xe00] sm:$0xff]
  %v496 = vld [vmem:[%s1 + $0xe08] sm:$0xff]
  %v497 = vld [vmem:[%s1 + $0xe10] sm:$0xff]
  %v498 = vld [vmem:[%s1 + $0xe18] sm:$0xff]
  %v499 = vld [vmem:[%s1 + $0xe20] sm:$0xff]
  %v500 = vld [vmem:[%s1 + $0xe28] sm:$0xff]
  %v501 = vld [vmem:[%s1 + $0xe30] sm:$0xff]
  %v502 = vld [vmem:[%s1 + $0xe38] sm:$0xff]
  %v503 = vld [vmem:[%s1 + $0xe40] sm:$0xff]
  %v504 = vld [vmem:[%s1 + $0xe48] sm:$0xff]
  %v505 = vld [vmem:[%s1 + $0xe50] sm:$0xff]
  %v506 = vld [vmem:[%s1 + $0xe58] sm:$0xff]
  %v507 = vld [vmem:[%s1 + $0xe60] sm:$0xff]
  %v508 = vld [vmem:[%s1 + $0xe68] sm:$0xff]
  %v509 = vld [vmem:[%s1 + $0xe70] sm:$0xff]
  %v510 = vld [vmem:[%s1 + $0xe78] sm:$0xff]
  %v511 = vld [vmem:[%s1 + $0xe80] sm:$0xff]
  %v512 = vld [vmem:[%s1 + $0xe88] sm:$0xff]
  %v513 = vld [vmem:[%s1 + $0xe90] sm:$0xff]
  %v514 = vld [vmem:[%s1 + $0xe98] sm:$0xff]
  %v515 = vld [vmem:[%s1 + $0xea0] sm:$0xff]
  %v516 = vld [vmem:[%s1 + $0xea8] sm:$0xff]
  %v517 = vld [vmem:[%s1 + $0xeb0] sm:$0xff]
  %v518 = vld [vmem:[%s1 + $0xeb8] sm:$0xff]
  %v519 = vld [vmem:[%s1 + $0xec0] sm:$0xff]
  %v520 = vld [vmem:[%s1 + $0xec8] sm:$0xff]
  %v521 = vld [vmem:[%s1 + $0xed0] sm:$0xff]
  %v522 = vld [vmem:[%s1 + $0xed8] sm:$0xff]
  %v523 = vld [vmem:[%s1 + $0xee0] sm:$0xff]
  %v524 = vld [vmem:[%s1 + $0xee8] sm:$0xff]
  %v525 = vld [vmem:[%s1 + $0xef0] sm:$0xff]
  %v526 = vld [vmem:[%s1 + $0xef8] sm:$0xff]
  %v527 = vld [vmem:[%s1 + $0xf00] sm:$0xff]
  %v528 = vld [vmem:[%s1 + $0xf08] sm:$0xff]
  %v529 = vld [vmem:[%s1 + $0xf10] sm:$0xff]
  %v530 = vld [vmem:[%s1 + $0xf18] sm:$0xff]
  %v531 = vld [vmem:[%s1 + $0xf20] sm:$0xff]
  %v532 = vld [vmem:[%s1 + $0xf28] sm:$0xff]
  %v533 = vld [vmem:[%s1 + $0xf30] sm:$0xff]
  %v534 = vld [vmem:[%s1 + $0xf38] sm:$0xff]
  %v535 = vld [vmem:[%s1 + $0xf40] sm:$0xff]
  %v536 = vld [vmem:[%s1 + $0xf48] sm:$0xff]
  %v537 = vld [vmem:[%s1 + $0xf50] sm:$0xff]
  %v538 = vld [vmem:[%s1 + $0xf58] sm:$0xff]
  %v539 = vld [vmem:[%s1 + $0xf60] sm:$0xff]
  %v540 = vld [vmem:[%s1 + $0xf68] sm:$0xff]
  %v541 = vld [vmem:[%s1 + $0xf70] sm:$0xff]
  %v542 = vld [vmem:[%s1 + $0xf78] sm:$0xff]
  %v543 = vld [vmem:[%s1 + $0xf80] sm:$0xff]
  %v544 = vld [vmem:[%s1 + $0xf88] sm:$0xff]
  %v545 = vld [vmem:[%s1 + $0xf90] sm:$0xff]
  %v546 = vld [vmem:[%s1 + $0xf98] sm:$0xff]
  %v547 = vld [vmem:[%s1 + $0xfa0] sm:$0xff]
  %v548 = vld [vmem:[%s1 + $0xfa8] sm:$0xff]
  %v549 = vld [vmem:[%s1 + $0xfb0] sm:$0xff]
  %v550 = vld [vmem:[%s1 + $0xfb8] sm:$0xff]
  %v551 = vld [vmem:[%s1 + $0xfc0] sm:$0xff]
  %v552 = vld [vmem:[%s1 + $0xfc8] sm:$0xff]
  %v553 = vld [vmem:[%s1 + $0xfd0] sm:$0xff]
  %v554 = vld [vmem:[%s1 + $0xfd8] sm:$0xff]
  %v555 = vld [vmem:[%s1 + $0xfe0] sm:$0xff]
  %v556 = vld [vmem:[%s1 + $0xfe8] sm:$0xff]
  %v557 = vld [vmem:[%s1 + $0xff0] sm:$0xff]
  %v558 = vld [vmem:[%s1 + $0xff8] sm:$0xff]
  %s559 = sld [smem:[#allocation2]]
  %v560 = vstv %s559
  %561 = vmatpush.msra.mxu0 %v62
  %562 = vmatpush.msra.mxu0 %v61
  %563 = vmatpush.msra.mxu0 %v60
  %564 = vmatpush.msra.mxu0 %v59
  %565 = vmatpush.msra.mxu0 %v58
  %566 = vmatpush.msra.mxu0 %v57
  %567 = vmatpush.msra.mxu0 %v56
  %568 = vmatpush.msra.mxu0 %v55
  %569 = vmatpush.msra.mxu0 %v54
  %570 = vmatpush.msra.mxu0 %v53
  %571 = vmatpush.msra.mxu0 %v52
  %572 = vmatpush.msra.mxu0 %v51
  %573 = vmatpush.msra.mxu0 %v50
  %574 = vmatpush.msra.mxu0 %v49
  %575 = vmatpush.msra.mxu0 %v48
  %576 = vmatpush.msra.mxu0 %v47
  %577 = vmatmul.f32.gmra.mxu0 %v15
  %v578 = vpop.f32.mrf.mxu0
  %v579 = vadd.f32 %v560, %v578
  %580 = vdwg.mxu0
  %581 = vmatpush.msra.mxu0 %v78
  %582 = vmatpush.msra.mxu0 %v77
  %583 = vmatpush.msra.mxu0 %v76
  %584 = vmatpush.msra.mxu0 %v75
  %585 = vmatpush.msra.mxu0 %v74
  %586 = vmatpush.msra.mxu0 %v73
  %587 = vmatpush.msra.mxu0 %v72
  %588 = vmatpush.msra.mxu0 %v71
  %589 = vmatpush.msra.mxu0 %v70
  %590 = vmatpush.msra.mxu0 %v69
  %591 = vmatpush.msra.mxu0 %v68
  %592 = vmatpush.msra.mxu0 %v67
  %593 = vmatpush.msra.mxu0 %v66
  %594 = vmatpush.msra.mxu0 %v65
  %595 = vmatpush.msra.mxu0 %v64
  %596 = vmatpush.msra.mxu0 %v63
  %597 = vmatmul.f32.gmra.mxu0 %v16
  %v598 = vpop.f32.mrf.mxu0
  %v599 = vadd.f32 %v579, %v598
  %600 = vdwg.mxu0
  %601 = vmatpush.msra.mxu0 %v94
  %602 = vmatpush.msra.mxu0 %v93
  %603 = vmatpush.msra.mxu0 %v92
  %604 = vmatpush.msra.mxu0 %v91
  %605 = vmatpush.msra.mxu0 %v90
  %606 = vmatpush.msra.mxu0 %v89
  %607 = vmatpush.msra.mxu0 %v88
  %608 = vmatpush.msra.mxu0 %v87
  %609 = vmatpush.msra.mxu0 %v86
  %610 = vmatpush.msra.mxu0 %v85
  %611 = vmatpush.msra.mxu0 %v84
  %612 = vmatpush.msra.mxu0 %v83
  %613 = vmatpush.msra.mxu0 %v82
  %614 = vmatpush.msra.mxu0 %v81
  %615 = vmatpush.msra.mxu0 %v80
  %616 = vmatpush.msra.mxu0 %v79
  %617 = vmatmul.f32.gmra.mxu0 %v17
  %v618 = vpop.f32.mrf.mxu0
  %v619 = vadd.f32 %v599, %v618
  %620 = vdwg.mxu0
  %621 = vmatpush.msra.mxu0 %v110
  %622 = vmatpush.msra.mxu0 %v109
  %623 = vmatpush.msra.mxu0 %v108
  %624 = vmatpush.msra.mxu0 %v107
  %625 = vmatpush.msra.mxu0 %v106
  %626 = vmatpush.msra.mxu0 %v105
  %627 = vmatpush.msra.mxu0 %v104
  %628 = vmatpush.msra.mxu0 %v103
  %629 = vmatpush.msra.mxu0 %v102
  %630 = vmatpush.msra.mxu0 %v101
  %631 = vmatpush.msra.mxu0 %v100
  %632 = vmatpush.msra.mxu0 %v99
  %633 = vmatpush.msra.mxu0 %v98
  %634 = vmatpush.msra.mxu0 %v97
  %635 = vmatpush.msra.mxu0 %v96
  %636 = vmatpush.msra.mxu0 %v95
  %637 = vmatmul.f32.gmra.mxu0 %v18
  %v638 = vpop.f32.mrf.mxu0
  %v639 = vadd.f32 %v619, %v638
  %640 = vdwg.mxu0
  %641 = vmatpush.msra.mxu0 %v126
  %642 = vmatpush.msra.mxu0 %v125
  %643 = vmatpush.msra.mxu0 %v124
  %644 = vmatpush.msra.mxu0 %v123
  %645 = vmatpush.msra.mxu0 %v122
  %646 = vmatpush.msra.mxu0 %v121
  %647 = vmatpush.msra.mxu0 %v120
  %648 = vmatpush.msra.mxu0 %v119
  %649 = vmatpush.msra.mxu0 %v118
  %650 = vmatpush.msra.mxu0 %v117
  %651 = vmatpush.msra.mxu0 %v116
  %652 = vmatpush.msra.mxu0 %v115
  %653 = vmatpush.msra.mxu0 %v114
  %654 = vmatpush.msra.mxu0 %v113
  %655 = vmatpush.msra.mxu0 %v112
  %656 = vmatpush.msra.mxu0 %v111
  %657 = vmatmul.f32.gmra.mxu0 %v19
  %v658 = vpop.f32.mrf.mxu0
  %v659 = vadd.f32 %v639, %v658
  %660 = vdwg.mxu0
  %661 = vmatpush.msra.mxu0 %v142
  %662 = vmatpush.msra.mxu0 %v141
  %663 = vmatpush.msra.mxu0 %v140
  %664 = vmatpush.msra.mxu0 %v139
  %665 = vmatpush.msra.mxu0 %v138
  %666 = vmatpush.msra.mxu0 %v137
  %667 = vmatpush.msra.mxu0 %v136
  %668 = vmatpush.msra.mxu0 %v135
  %669 = vmatpush.msra.mxu0 %v134
  %670 = vmatpush.msra.mxu0 %v133
  %671 = vmatpush.msra.mxu0 %v132
  %672 = vmatpush.msra.mxu0 %v131
  %673 = vmatpush.msra.mxu0 %v130
  %674 = vmatpush.msra.mxu0 %v129
  %675 = vmatpush.msra.mxu0 %v128
  %676 = vmatpush.msra.mxu0 %v127
  %677 = vmatmul.f32.gmra.mxu0 %v20
  %v678 = vpop.f32.mrf.mxu0
  %v679 = vadd.f32 %v659, %v678
  %680 = vdwg.mxu0
  %681 = vmatpush.msra.mxu0 %v158
  %682 = vmatpush.msra.mxu0 %v157
  %683 = vmatpush.msra.mxu0 %v156
  %684 = vmatpush.msra.mxu0 %v155
  %685 = vmatpush.msra.mxu0 %v154
  %686 = vmatpush.msra.mxu0 %v153
  %687 = vmatpush.msra.mxu0 %v152
  %688 = vmatpush.msra.mxu0 %v151
  %689 = vmatpush.msra.mxu0 %v150
  %690 = vmatpush.msra.mxu0 %v149
  %691 = vmatpush.msra.mxu0 %v148
  %692 = vmatpush.msra.mxu0 %v147
  %693 = vmatpush.msra.mxu0 %v146
  %694 = vmatpush.msra.mxu0 %v145
  %695 = vmatpush.msra.mxu0 %v144
  %696 = vmatpush.msra.mxu0 %v143
  %697 = vmatmul.f32.gmra.mxu0 %v21
  %v698 = vpop.f32.mrf.mxu0
  %v699 = vadd.f32 %v679, %v698
  %700 = vdwg.mxu0
  %701 = vmatpush.msra.mxu0 %v174
  %702 = vmatpush.msra.mxu0 %v173
  %703 = vmatpush.msra.mxu0 %v172
  %704 = vmatpush.msra.mxu0 %v171
  %705 = vmatpush.msra.mxu0 %v170
  %706 = vmatpush.msra.mxu0 %v169
  %707 = vmatpush.msra.mxu0 %v168
  %708 = vmatpush.msra.mxu0 %v167
  %709 = vmatpush.msra.mxu0 %v166
  %710 = vmatpush.msra.mxu0 %v165
  %711 = vmatpush.msra.mxu0 %v164
  %712 = vmatpush.msra.mxu0 %v163
  %713 = vmatpush.msra.mxu0 %v162
  %714 = vmatpush.msra.mxu0 %v161
  %715 = vmatpush.msra.mxu0 %v160
  %716 = vmatpush.msra.mxu0 %v159
  %717 = vmatmul.f32.gmra.mxu0 %v22
  %v718 = vpop.f32.mrf.mxu0
  %v719 = vadd.f32 %v699, %v718
  %720 = vdwg.mxu0
  %721 = vmatpush.msra.mxu0 %v190
  %722 = vmatpush.msra.mxu0 %v189
  %723 = vmatpush.msra.mxu0 %v188
  %724 = vmatpush.msra.mxu0 %v187
  %725 = vmatpush.msra.mxu0 %v186
  %726 = vmatpush.msra.mxu0 %v185
  %727 = vmatpush.msra.mxu0 %v184
  %728 = vmatpush.msra.mxu0 %v183
  %729 = vmatpush.msra.mxu0 %v182
  %730 = vmatpush.msra.mxu0 %v181
  %731 = vmatpush.msra.mxu0 %v180
  %732 = vmatpush.msra.mxu0 %v179
  %733 = vmatpush.msra.mxu0 %v178
  %734 = vmatpush.msra.mxu0 %v177
  %735 = vmatpush.msra.mxu0 %v176
  %736 = vmatpush.msra.mxu0 %v175
  %737 = vmatmul.f32.gmra.mxu0 %v23
  %v738 = vpop.f32.mrf.mxu0
  %v739 = vadd.f32 %v719, %v738
  %740 = vdwg.mxu0
  %741 = vmatpush.msra.mxu0 %v206
  %742 = vmatpush.msra.mxu0 %v205
  %743 = vmatpush.msra.mxu0 %v204
  %744 = vmatpush.msra.mxu0 %v203
  %745 = vmatpush.msra.mxu0 %v202
  %746 = vmatpush.msra.mxu0 %v201
  %747 = vmatpush.msra.mxu0 %v200
  %748 = vmatpush.msra.mxu0 %v199
  %749 = vmatpush.msra.mxu0 %v198
  %750 = vmatpush.msra.mxu0 %v197
  %751 = vmatpush.msra.mxu0 %v196
  %752 = vmatpush.msra.mxu0 %v195
  %753 = vmatpush.msra.mxu0 %v194
  %754 = vmatpush.msra.mxu0 %v193
  %755 = vmatpush.msra.mxu0 %v192
  %756 = vmatpush.msra.mxu0 %v191
  %757 = vmatmul.f32.gmra.mxu0 %v24
  %v758 = vpop.f32.mrf.mxu0
  %v759 = vadd.f32 %v739, %v758
  %760 = vdwg.mxu0
  %761 = vmatpush.msra.mxu0 %v222
  %762 = vmatpush.msra.mxu0 %v221
  %763 = vmatpush.msra.mxu0 %v220
  %764 = vmatpush.msra.mxu0 %v219
  %765 = vmatpush.msra.mxu0 %v218
  %766 = vmatpush.msra.mxu0 %v217
  %767 = vmatpush.msra.mxu0 %v216
  %768 = vmatpush.msra.mxu0 %v215
  %769 = vmatpush.msra.mxu0 %v214
  %770 = vmatpush.msra.mxu0 %v213
  %771 = vmatpush.msra.mxu0 %v212
  %772 = vmatpush.msra.mxu0 %v211
  %773 = vmatpush.msra.mxu0 %v210
  %774 = vmatpush.msra.mxu0 %v209
  %775 = vmatpush.msra.mxu0 %v208
  %776 = vmatpush.msra.mxu0 %v207
  %777 = vmatmul.f32.gmra.mxu0 %v25
  %v778 = vpop.f32.mrf.mxu0
  %v779 = vadd.f32 %v759, %v778
  %780 = vdwg.mxu0
  %781 = vmatpush.msra.mxu0 %v238
  %782 = vmatpush.msra.mxu0 %v237
  %783 = vmatpush.msra.mxu0 %v236
  %784 = vmatpush.msra.mxu0 %v235
  %785 = vmatpush.msra.mxu0 %v234
  %786 = vmatpush.msra.mxu0 %v233
  %787 = vmatpush.msra.mxu0 %v232
  %788 = vmatpush.msra.mxu0 %v231
  %789 = vmatpush.msra.mxu0 %v230
  %790 = vmatpush.msra.mxu0 %v229
  %791 = vmatpush.msra.mxu0 %v228
  %792 = vmatpush.msra.mxu0 %v227
  %793 = vmatpush.msra.mxu0 %v226
  %794 = vmatpush.msra.mxu0 %v225
  %795 = vmatpush.msra.mxu0 %v224
  %796 = vmatpush.msra.mxu0 %v223
  %797 = vmatmul.f32.gmra.mxu0 %v26
  %v798 = vpop.f32.mrf.mxu0
  %v799 = vadd.f32 %v779, %v798
  %800 = vdwg.mxu0
  %801 = vmatpush.msra.mxu0 %v254
  %802 = vmatpush.msra.mxu0 %v253
  %803 = vmatpush.msra.mxu0 %v252
  %804 = vmatpush.msra.mxu0 %v251
  %805 = vmatpush.msra.mxu0 %v250
  %806 = vmatpush.msra.mxu0 %v249
  %807 = vmatpush.msra.mxu0 %v248
  %808 = vmatpush.msra.mxu0 %v247
  %809 = vmatpush.msra.mxu0 %v246
  %810 = vmatpush.msra.mxu0 %v245
  %811 = vmatpush.msra.mxu0 %v244
  %812 = vmatpush.msra.mxu0 %v243
  %813 = vmatpush.msra.mxu0 %v242
  %814 = vmatpush.msra.mxu0 %v241
  %815 = vmatpush.msra.mxu0 %v240
  %816 = vmatpush.msra.mxu0 %v239
  %817 = vmatmul.f32.gmra.mxu0 %v27
  %v818 = vpop.f32.mrf.mxu0
  %v819 = vadd.f32 %v799, %v818
  %820 = vdwg.mxu0
  %821 = vmatpush.msra.mxu0 %v270
  %822 = vmatpush.msra.mxu0 %v269
  %823 = vmatpush.msra.mxu0 %v268
  %824 = vmatpush.msra.mxu0 %v267
  %825 = vmatpush.msra.mxu0 %v266
  %826 = vmatpush.msra.mxu0 %v265
  %827 = vmatpush.msra.mxu0 %v264
  %828 = vmatpush.msra.mxu0 %v263
  %829 = vmatpush.msra.mxu0 %v262
  %830 = vmatpush.msra.mxu0 %v261
  %831 = vmatpush.msra.mxu0 %v260
  %832 = vmatpush.msra.mxu0 %v259
  %833 = vmatpush.msra.mxu0 %v258
  %834 = vmatpush.msra.mxu0 %v257
  %835 = vmatpush.msra.mxu0 %v256
  %836 = vmatpush.msra.mxu0 %v255
  %837 = vmatmul.f32.gmra.mxu0 %v28
  %v838 = vpop.f32.mrf.mxu0
  %v839 = vadd.f32 %v819, %v838
  %840 = vdwg.mxu0
  %841 = vmatpush.msra.mxu0 %v286
  %842 = vmatpush.msra.mxu0 %v285
  %843 = vmatpush.msra.mxu0 %v284
  %844 = vmatpush.msra.mxu0 %v283
  %845 = vmatpush.msra.mxu0 %v282
  %846 = vmatpush.msra.mxu0 %v281
  %847 = vmatpush.msra.mxu0 %v280
  %848 = vmatpush.msra.mxu0 %v279
  %849 = vmatpush.msra.mxu0 %v278
  %850 = vmatpush.msra.mxu0 %v277
  %851 = vmatpush.msra.mxu0 %v276
  %852 = vmatpush.msra.mxu0 %v275
  %853 = vmatpush.msra.mxu0 %v274
  %854 = vmatpush.msra.mxu0 %v273
  %855 = vmatpush.msra.mxu0 %v272
  %856 = vmatpush.msra.mxu0 %v271
  %857 = vmatmul.f32.gmra.mxu0 %v29
  %v858 = vpop.f32.mrf.mxu0
  %v859 = vadd.f32 %v839, %v858
  %860 = vdwg.mxu0
  %861 = vmatpush.msra.mxu0 %v302
  %862 = vmatpush.msra.mxu0 %v301
  %863 = vmatpush.msra.mxu0 %v300
  %864 = vmatpush.msra.mxu0 %v299
  %865 = vmatpush.msra.mxu0 %v298
  %866 = vmatpush.msra.mxu0 %v297
  %867 = vmatpush.msra.mxu0 %v296
  %868 = vmatpush.msra.mxu0 %v295
  %869 = vmatpush.msra.mxu0 %v294
  %870 = vmatpush.msra.mxu0 %v293
  %871 = vmatpush.msra.mxu0 %v292
  %872 = vmatpush.msra.mxu0 %v291
  %873 = vmatpush.msra.mxu0 %v290
  %874 = vmatpush.msra.mxu0 %v289
  %875 = vmatpush.msra.mxu0 %v288
  %876 = vmatpush.msra.mxu0 %v287
  %877 = vmatmul.f32.gmra.mxu0 %v30
  %v878 = vpop.f32.mrf.mxu0
  %v879 = vadd.f32 %v859, %v878
  %880 = vdwg.mxu0
  %881 = vmatpush.msra.mxu0 %v318
  %882 = vmatpush.msra.mxu0 %v317
  %883 = vmatpush.msra.mxu0 %v316
  %884 = vmatpush.msra.mxu0 %v315
  %885 = vmatpush.msra.mxu0 %v314
  %886 = vmatpush.msra.mxu0 %v313
  %887 = vmatpush.msra.mxu0 %v312
  %888 = vmatpush.msra.mxu0 %v311
  %889 = vmatpush.msra.mxu0 %v310
  %890 = vmatpush.msra.mxu0 %v309
  %891 = vmatpush.msra.mxu0 %v308
  %892 = vmatpush.msra.mxu0 %v307
  %893 = vmatpush.msra.mxu0 %v306
  %894 = vmatpush.msra.mxu0 %v305
  %895 = vmatpush.msra.mxu0 %v304
  %896 = vmatpush.msra.mxu0 %v303
  %897 = vmatmul.f32.gmra.mxu0 %v31
  %v898 = vpop.f32.mrf.mxu0
  %v899 = vadd.f32 %v879, %v898
  %900 = vdwg.mxu0
  %901 = vmatpush.msra.mxu0 %v334
  %902 = vmatpush.msra.mxu0 %v333
  %903 = vmatpush.msra.mxu0 %v332
  %904 = vmatpush.msra.mxu0 %v331
  %905 = vmatpush.msra.mxu0 %v330
  %906 = vmatpush.msra.mxu0 %v329
  %907 = vmatpush.msra.mxu0 %v328
  %908 = vmatpush.msra.mxu0 %v327
  %909 = vmatpush.msra.mxu0 %v326
  %910 = vmatpush.msra.mxu0 %v325
  %911 = vmatpush.msra.mxu0 %v324
  %912 = vmatpush.msra.mxu0 %v323
  %913 = vmatpush.msra.mxu0 %v322
  %914 = vmatpush.msra.mxu0 %v321
  %915 = vmatpush.msra.mxu0 %v320
  %916 = vmatpush.msra.mxu0 %v319
  %917 = vmatmul.f32.gmra.mxu0 %v32
  %v918 = vpop.f32.mrf.mxu0
  %v919 = vadd.f32 %v899, %v918
  %920 = vdwg.mxu0
  %921 = vmatpush.msra.mxu0 %v350
  %922 = vmatpush.msra.mxu0 %v349
  %923 = vmatpush.msra.mxu0 %v348
  %924 = vmatpush.msra.mxu0 %v347
  %925 = vmatpush.msra.mxu0 %v346
  %926 = vmatpush.msra.mxu0 %v345
  %927 = vmatpush.msra.mxu0 %v344
  %928 = vmatpush.msra.mxu0 %v343
  %929 = vmatpush.msra.mxu0 %v342
  %930 = vmatpush.msra.mxu0 %v341
  %931 = vmatpush.msra.mxu0 %v340
  %932 = vmatpush.msra.mxu0 %v339
  %933 = vmatpush.msra.mxu0 %v338
  %934 = vmatpush.msra.mxu0 %v337
  %935 = vmatpush.msra.mxu0 %v336
  %936 = vmatpush.msra.mxu0 %v335
  %937 = vmatmul.f32.gmra.mxu0 %v33
  %v938 = vpop.f32.mrf.mxu0
  %v939 = vadd.f32 %v919, %v938
  %940 = vdwg.mxu0
  %941 = vmatpush.msra.mxu0 %v366
  %942 = vmatpush.msra.mxu0 %v365
  %943 = vmatpush.msra.mxu0 %v364
  %944 = vmatpush.msra.mxu0 %v363
  %945 = vmatpush.msra.mxu0 %v362
  %946 = vmatpush.msra.mxu0 %v361
  %947 = vmatpush.msra.mxu0 %v360
  %948 = vmatpush.msra.mxu0 %v359
  %949 = vmatpush.msra.mxu0 %v358
  %950 = vmatpush.msra.mxu0 %v357
  %951 = vmatpush.msra.mxu0 %v356
  %952 = vmatpush.msra.mxu0 %v355
  %953 = vmatpush.msra.mxu0 %v354
  %954 = vmatpush.msra.mxu0 %v353
  %955 = vmatpush.msra.mxu0 %v352
  %956 = vmatpush.msra.mxu0 %v351
  %957 = vmatmul.f32.gmra.mxu0 %v34
  %v958 = vpop.f32.mrf.mxu0
  %v959 = vadd.f32 %v939, %v958
  %960 = vdwg.mxu0
  %961 = vmatpush.msra.mxu0 %v382
  %962 = vmatpush.msra.mxu0 %v381
  %963 = vmatpush.msra.mxu0 %v380
  %964 = vmatpush.msra.mxu0 %v379
  %965 = vmatpush.msra.mxu0 %v378
  %966 = vmatpush.msra.mxu0 %v377
  %967 = vmatpush.msra.mxu0 %v376
  %968 = vmatpush.msra.mxu0 %v375
  %969 = vmatpush.msra.mxu0 %v374
  %970 = vmatpush.msra.mxu0 %v373
  %971 = vmatpush.msra.mxu0 %v372
  %972 = vmatpush.msra.mxu0 %v371
  %973 = vmatpush.msra.mxu0 %v370
  %974 = vmatpush.msra.mxu0 %v369
  %975 = vmatpush.msra.mxu0 %v368
  %976 = vmatpush.msra.mxu0 %v367
  %977 = vmatmul.f32.gmra.mxu0 %v35
  %v978 = vpop.f32.mrf.mxu0
  %v979 = vadd.f32 %v959, %v978
  %980 = vdwg.mxu0
  %981 = vmatpush.msra.mxu0 %v398
  %982 = vmatpush.msra.mxu0 %v397
  %983 = vmatpush.msra.mxu0 %v396
  %984 = vmatpush.msra.mxu0 %v395
  %985 = vmatpush.msra.mxu0 %v394
  %986 = vmatpush.msra.mxu0 %v393
  %987 = vmatpush.msra.mxu0 %v392
  %988 = vmatpush.msra.mxu0 %v391
  %989 = vmatpush.msra.mxu0 %v390
  %990 = vmatpush.msra.mxu0 %v389
  %991 = vmatpush.msra.mxu0 %v388
  %992 = vmatpush.msra.mxu0 %v387
  %993 = vmatpush.msra.mxu0 %v386
  %994 = vmatpush.msra.mxu0 %v385
  %995 = vmatpush.msra.mxu0 %v384
  %996 = vmatpush.msra.mxu0 %v383
  %997 = vmatmul.f32.gmra.mxu0 %v36
  %v998 = vpop.f32.mrf.mxu0
  %v999 = vadd.f32 %v979, %v998
  %1000 = vdwg.mxu0
  %1001 = vmatpush.msra.mxu0 %v414
  %1002 = vmatpush.msra.mxu0 %v413
  %1003 = vmatpush.msra.mxu0 %v412
  %1004 = vmatpush.msra.mxu0 %v411
  %1005 = vmatpush.msra.mxu0 %v410
  %1006 = vmatpush.msra.mxu0 %v409
  %1007 = vmatpush.msra.mxu0 %v408
  %1008 = vmatpush.msra.mxu0 %v407
  %1009 = vmatpush.msra.mxu0 %v406
  %1010 = vmatpush.msra.mxu0 %v405
  %1011 = vmatpush.msra.mxu0 %v404
  %1012 = vmatpush.msra.mxu0 %v403
  %1013 = vmatpush.msra.mxu0 %v402
  %1014 = vmatpush.msra.mxu0 %v401
  %1015 = vmatpush.msra.mxu0 %v400
  %1016 = vmatpush.msra.mxu0 %v399
  %1017 = vmatmul.f32.gmra.mxu0 %v37
  %v1018 = vpop.f32.mrf.mxu0
  %v1019 = vadd.f32 %v999, %v1018
  %1020 = vdwg.mxu0
  %1021 = vmatpush.msra.mxu0 %v430
  %1022 = vmatpush.msra.mxu0 %v429
  %1023 = vmatpush.msra.mxu0 %v428
  %1024 = vmatpush.msra.mxu0 %v427
  %1025 = vmatpush.msra.mxu0 %v426
  %1026 = vmatpush.msra.mxu0 %v425
  %1027 = vmatpush.msra.mxu0 %v424
  %1028 = vmatpush.msra.mxu0 %v423
  %1029 = vmatpush.msra.mxu0 %v422
  %1030 = vmatpush.msra.mxu0 %v421
  %1031 = vmatpush.msra.mxu0 %v420
  %1032 = vmatpush.msra.mxu0 %v419
  %1033 = vmatpush.msra.mxu0 %v418
  %1034 = vmatpush.msra.mxu0 %v417
  %1035 = vmatpush.msra.mxu0 %v416
  %1036 = vmatpush.msra.mxu0 %v415
  %1037 = vmatmul.f32.gmra.mxu0 %v38
  %v1038 = vpop.f32.mrf.mxu0
  %v1039 = vadd.f32 %v1019, %v1038
  %1040 = vdwg.mxu0
  %1041 = vmatpush.msra.mxu0 %v446
  %1042 = vmatpush.msra.mxu0 %v445
  %1043 = vmatpush.msra.mxu0 %v444
  %1044 = vmatpush.msra.mxu0 %v443
  %1045 = vmatpush.msra.mxu0 %v442
  %1046 = vmatpush.msra.mxu0 %v441
  %1047 = vmatpush.msra.mxu0 %v440
  %1048 = vmatpush.msra.mxu0 %v439
  %1049 = vmatpush.msra.mxu0 %v438
  %1050 = vmatpush.msra.mxu0 %v437
  %1051 = vmatpush.msra.mxu0 %v436
  %1052 = vmatpush.msra.mxu0 %v435
  %1053 = vmatpush.msra.mxu0 %v434
  %1054 = vmatpush.msra.mxu0 %v433
  %1055 = vmatpush.msra.mxu0 %v432
  %1056 = vmatpush.msra.mxu0 %v431
  %1057 = vmatmul.f32.gmra.mxu0 %v39
  %v1058 = vpop.f32.mrf.mxu0
  %v1059 = vadd.f32 %v1039, %v1058
  %1060 = vdwg.mxu0
  %1061 = vmatpush.msra.mxu0 %v462
  %1062 = vmatpush.msra.mxu0 %v461
  %1063 = vmatpush.msra.mxu0 %v460
  %1064 = vmatpush.msra.mxu0 %v459
  %1065 = vmatpush.msra.mxu0 %v458
  %1066 = vmatpush.msra.mxu0 %v457
  %1067 = vmatpush.msra.mxu0 %v456
  %1068 = vmatpush.msra.mxu0 %v455
  %1069 = vmatpush.msra.mxu0 %v454
  %1070 = vmatpush.msra.mxu0 %v453
  %1071 = vmatpush.msra.mxu0 %v452
  %1072 = vmatpush.msra.mxu0 %v451
  %1073 = vmatpush.msra.mxu0 %v450
  %1074 = vmatpush.msra.mxu0 %v449
  %1075 = vmatpush.msra.mxu0 %v448
  %1076 = vmatpush.msra.mxu0 %v447
  %1077 = vmatmul.f32.gmra.mxu0 %v40
  %v1078 = vpop.f32.mrf.mxu0
  %v1079 = vadd.f32 %v1059, %v1078
  %1080 = vdwg.mxu0
  %1081 = vmatpush.msra.mxu0 %v478
  %1082 = vmatpush.msra.mxu0 %v477
  %1083 = vmatpush.msra.mxu0 %v476
  %1084 = vmatpush.msra.mxu0 %v475
  %1085 = vmatpush.msra.mxu0 %v474
  %1086 = vmatpush.msra.mxu0 %v473
  %1087 = vmatpush.msra.mxu0 %v472
  %1088 = vmatpush.msra.mxu0 %v471
  %1089 = vmatpush.msra.mxu0 %v470
  %1090 = vmatpush.msra.mxu0 %v469
  %1091 = vmatpush.msra.mxu0 %v468
  %1092 = vmatpush.msra.mxu0 %v467
  %1093 = vmatpush.msra.mxu0 %v466
  %1094 = vmatpush.msra.mxu0 %v465
  %1095 = vmatpush.msra.mxu0 %v464
  %1096 = vmatpush.msra.mxu0 %v463
  %1097 = vmatmul.f32.gmra.mxu0 %v41
  %v1098 = vpop.f32.mrf.mxu0
  %v1099 = vadd.f32 %v1079, %v1098
  %1100 = vdwg.mxu0
  %1101 = vmatpush.msra.mxu0 %v494
  %1102 = vmatpush.msra.mxu0 %v493
  %1103 = vmatpush.msra.mxu0 %v492
  %1104 = vmatpush.msra.mxu0 %v491
  %1105 = vmatpush.msra.mxu0 %v490
  %1106 = vmatpush.msra.mxu0 %v489
  %1107 = vmatpush.msra.mxu0 %v488
  %1108 = vmatpush.msra.mxu0 %v487
  %1109 = vmatpush.msra.mxu0 %v486
  %1110 = vmatpush.msra.mxu0 %v485
  %1111 = vmatpush.msra.mxu0 %v484
  %1112 = vmatpush.msra.mxu0 %v483
  %1113 = vmatpush.msra.mxu0 %v482
  %1114 = vmatpush.msra.mxu0 %v481
  %1115 = vmatpush.msra.mxu0 %v480
  %1116 = vmatpush.msra.mxu0 %v479
  %1117 = vmatmul.f32.gmra.mxu0 %v42
  %v1118 = vpop.f32.mrf.mxu0
  %v1119 = vadd.f32 %v1099, %v1118
  %1120 = vdwg.mxu0
  %1121 = vmatpush.msra.mxu0 %v510
  %1122 = vmatpush.msra.mxu0 %v509
  %1123 = vmatpush.msra.mxu0 %v508
  %1124 = vmatpush.msra.mxu0 %v507
  %1125 = vmatpush.msra.mxu0 %v506
  %1126 = vmatpush.msra.mxu0 %v505
  %1127 = vmatpush.msra.mxu0 %v504
  %1128 = vmatpush.msra.mxu0 %v503
  %1129 = vmatpush.msra.mxu0 %v502
  %1130 = vmatpush.msra.mxu0 %v501
  %1131 = vmatpush.msra.mxu0 %v500
  %1132 = vmatpush.msra.mxu0 %v499
  %1133 = vmatpush.msra.mxu0 %v498
  %1134 = vmatpush.msra.mxu0 %v497
  %1135 = vmatpush.msra.mxu0 %v496
  %1136 = vmatpush.msra.mxu0 %v495
  %1137 = vmatmul.f32.gmra.mxu0 %v43
  %v1138 = vpop.f32.mrf.mxu0
  %v1139 = vadd.f32 %v1119, %v1138
  %1140 = vdwg.mxu0
  %1141 = vmatpush.msra.mxu0 %v526
  %1142 = vmatpush.msra.mxu0 %v525
  %1143 = vmatpush.msra.mxu0 %v524
  %1144 = vmatpush.msra.mxu0 %v523
  %1145 = vmatpush.msra.mxu0 %v522
  %1146 = vmatpush.msra.mxu0 %v521
  %1147 = vmatpush.msra.mxu0 %v520
  %1148 = vmatpush.msra.mxu0 %v519
  %1149 = vmatpush.msra.mxu0 %v518
  %1150 = vmatpush.msra.mxu0 %v517
  %1151 = vmatpush.msra.mxu0 %v516
  %1152 = vmatpush.msra.mxu0 %v515
  %1153 = vmatpush.msra.mxu0 %v514
  %1154 = vmatpush.msra.mxu0 %v513
  %1155 = vmatpush.msra.mxu0 %v512
  %1156 = vmatpush.msra.mxu0 %v511
  %1157 = vmatmul.f32.gmra.mxu0 %v44
  %v1158 = vpop.f32.mrf.mxu0
  %v1159 = vadd.f32 %v1139, %v1158
  %1160 = vdwg.mxu0
  %1161 = vmatpush.msra.mxu0 %v542
  %1162 = vmatpush.msra.mxu0 %v541
  %1163 = vmatpush.msra.mxu0 %v540
  %1164 = vmatpush.msra.mxu0 %v539
  %1165 = vmatpush.msra.mxu0 %v538
  %1166 = vmatpush.msra.mxu0 %v537
  %1167 = vmatpush.msra.mxu0 %v536
  %1168 = vmatpush.msra.mxu0 %v535
  %1169 = vmatpush.msra.mxu0 %v534
  %1170 = vmatpush.msra.mxu0 %v533
  %1171 = vmatpush.msra.mxu0 %v532
  %1172 = vmatpush.msra.mxu0 %v531
  %1173 = vmatpush.msra.mxu0 %v530
  %1174 = vmatpush.msra.mxu0 %v529
  %1175 = vmatpush.msra.mxu0 %v528
  %1176 = vmatpush.msra.mxu0 %v527
  %1177 = vmatmul.f32.gmra.mxu0 %v45
  %v1178 = vpop.f32.mrf.mxu0
  %v1179 = vadd.f32 %v1159, %v1178
  %1180 = vdwg.mxu0
  %1181 = vmatpush.msra.mxu0 %v558
  %1182 = vmatpush.msra.mxu0 %v557
  %1183 = vmatpush.msra.mxu0 %v556
  %1184 = vmatpush.msra.mxu0 %v555
  %1185 = vmatpush.msra.mxu0 %v554
  %1186 = vmatpush.msra.mxu0 %v553
  %1187 = vmatpush.msra.mxu0 %v552
  %1188 = vmatpush.msra.mxu0 %v551
  %1189 = vmatpush.msra.mxu0 %v550
  %1190 = vmatpush.msra.mxu0 %v549
  %1191 = vmatpush.msra.mxu0 %v548
  %1192 = vmatpush.msra.mxu0 %v547
  %1193 = vmatpush.msra.mxu0 %v546
  %1194 = vmatpush.msra.mxu0 %v545
  %1195 = vmatpush.msra.mxu0 %v544
  %1196 = vmatpush.msra.mxu0 %v543
  %1197 = vmatmul.f32.gmra.mxu0 %v46
  %v1198 = vpop.f32.mrf.mxu0
  %v1199 = vadd.f32 %v1179, %v1198
  %1200 = vdwg.mxu0
  %1201 = vst [vmem:[%s3] sm:$0xff] %v1199
  // Predicated region
  $region14: #{policy_forward.1} parent=0 // pred_check
    _
  $region15: #{policy_forward.1} parent=0 // pred_check_branch
    %1203 = sbr.rel (0) target = $region17
  $region16: #{policy_forward.1} parent=0 // pred_region
    _
  $region17: #{policy_forward.1} parent=0 // pred_fallthru
    _
  // Predicated region
  $region18: #{policy_forward.1} parent=0 // pred_check
    _
  $region19: #{policy_forward.1} parent=0 // pred_check_branch
    %1205 = sbr.rel (0) target = $region21
  $region20: #{policy_forward.1} parent=0 // pred_region
    _
  $region21: #{policy_forward.1} parent=0 // pred_fallthru
    _

</llo_original>
